<compile_context>
chip_gen: v7x
topology: tpu7x:2x2x1
jax: 0.10.0
libtpu: 0.0.40
codegen_flags: <defaults>
</compile_context>

<pallas_src>
import jax
import jax.numpy as jnp
from jax.experimental import pallas as pl
from jax.experimental.pallas import tpu as pltpu


def _round_up(x, m):
    return ((x + m - 1) // m) * m


def _linear_kernel_single_k(x_ref, w_ref, b_ref, o_ref):
    # x_ref: (tm, K)   w_ref: (K, tn)   b_ref: (1, tn)   o_ref: (tm, tn)
    acc = jnp.dot(x_ref[...], w_ref[...], preferred_element_type=jnp.float32)
    o_ref[...] = (acc + b_ref[...].astype(jnp.float32)).astype(o_ref.dtype)


def _linear_kernel_multi_k(x_ref, w_ref, b_ref, o_ref, acc_ref):
    # Fallback path when K does not fit a single tile: f32 accumulator resident
    # across the K grid axis with pl.when init / finalize.
    k = pl.program_id(2)

    @pl.when(k == 0)
    def _():
        acc_ref[...] = jnp.zeros_like(acc_ref)

    acc_ref[...] += jnp.dot(
        x_ref[...], w_ref[...], preferred_element_type=jnp.float32
    )

    @pl.when(k == pl.num_programs(2) - 1)
    def _():
        o_ref[...] = (
            acc_ref[...] + b_ref[...].astype(jnp.float32)
        ).astype(o_ref.dtype)


def prepare_classifier_params(weight, bias, *, tn=1024, tk=1024, param_dtype=None):
    """One-time (load-time) parameter prep.  Never call per forward step.

    weight: (out_features, in_features) PyTorch layout.
    Transposes to MXU-friendly (K, N), pads K/N up to tile multiples, and
    optionally casts the weight (e.g. to bf16).
    """
    N, K = weight.shape
    tk_eff = min(tk, _round_up(K, 128))
    tn_eff = min(tn, _round_up(N, 128))
    K_pad = _round_up(K, tk_eff)
    N_pad = _round_up(N, tn_eff)

    w_kn = weight.T  # (K, N): canonical contraction, no on-chip transpose
    if (K_pad, N_pad) != (K, N):
        w_kn = jnp.pad(w_kn, ((0, K_pad - K), (0, N_pad - N)))
    if param_dtype is not None:
        w_kn = w_kn.astype(param_dtype)

    b = bias if N_pad == N else jnp.pad(bias, (0, N_pad - N))
    b = b.reshape(1, N_pad).astype(jnp.float32)

    return {
        "w_kn": w_kn,
        "b": b,
        "out_features": N,
        "in_features": K,
        "tk": tk_eff,
        "tn": tn_eff,
    }


def classifier_forward(x, params, *, tm=512, compute_dtype=None):
    """Equivalent of nn.Linear(in_features, out_features)(x) with prepared params.

    x: (..., in_features).  Output dtype matches x.dtype; matmul accumulates in f32.
    """
    w_kn = params["w_kn"]
    b = params["b"]
    K = params["in_features"]
    N = params["out_features"]
    tk = params["tk"]
    tn = params["tn"]
    K_pad, N_pad = w_kn.shape

    assert x.shape[-1] == K, "last dim of x must equal in_features"
    lead_shape = x.shape[:-1]
    out_dtype = x.dtype

    x2d = x.reshape(-1, K)
    if compute_dtype is not None:
        x2d = x2d.astype(compute_dtype)
    M = x2d.shape[0]

    tm_eff = min(tm, _round_up(M, 8))
    M_pad = _round_up(M, tm_eff)
    if (M_pad, K_pad) != (M, K):
        x2d = jnp.pad(x2d, ((0, M_pad - M), (0, K_pad - K)))

    n_k = K_pad // tk
    cost = pl.CostEstimate(
        flops=2 * M_pad * N_pad * K_pad,
        transcendentals=0,
        bytes_accessed=(
            x2d.size * x2d.dtype.itemsize
            + w_kn.size * w_kn.dtype.itemsize
            + b.size * b.dtype.itemsize
            + M_pad * N_pad * jnp.dtype(out_dtype).itemsize
        ),
    )
    vmem_limit = 48 * 1024 * 1024  # safe on v5e/v6e (128 MiB) and v7x (64 MiB)

    if n_k == 1:
        # K fits one tile: no accumulator, no K axis.  N is the fast grid axis,
        # so the x block (i, 0) is reused across all N blocks without re-DMA.
        grid = (M_pad // tm_eff, N_pad // tn)
        out_p = pl.pallas_call(
            _linear_kernel_single_k,
            out_shape=jax.ShapeDtypeStruct((M_pad, N_pad), out_dtype),
            grid=grid,
            in_specs=[
                pl.BlockSpec((tm_eff, K_pad), lambda i, j: (i, 0)),
                # NOTE(perf): on large shapes, sweep pipeline_mode=pl.Buffered(3)
                # on this weight stream.
                pl.BlockSpec((K_pad, tn), lambda i, j: (0, j)),
                pl.BlockSpec((1, tn), lambda i, j: (0, j)),
            ],
            out_specs=pl.BlockSpec((tm_eff, tn), lambda i, j: (i, j)),
            compiler_params=pltpu.CompilerParams(
                dimension_semantics=("parallel", "parallel"),
                vmem_limit_bytes=vmem_limit,
            ),
            cost_estimate=cost,
        )(x2d, w_kn, b)
    else:
        grid = (M_pad // tm_eff, N_pad // tn, n_k)
        out_p = pl.pallas_call(
            _linear_kernel_multi_k,
            out_shape=jax.ShapeDtypeStruct((M_pad, N_pad), out_dtype),
            grid=grid,
            in_specs=[
                pl.BlockSpec((tm_eff, tk), lambda i, j, k: (i, k)),
                pl.BlockSpec((tk, tn), lambda i, j, k: (k, j)),
                pl.BlockSpec((1, tn), lambda i, j, k: (0, j)),
            ],
            out_specs=pl.BlockSpec((tm_eff, tn), lambda i, j, k: (i, j)),
            scratch_shapes=[pltpu.VMEM((tm_eff, tn), jnp.float32)],
            compiler_params=pltpu.CompilerParams(
                dimension_semantics=("parallel", "parallel", "arbitrary"),
                vmem_limit_bytes=vmem_limit,
            ),
            cost_estimate=cost,
        )(x2d, w_kn, b)

    out2d = out_p[:M, :N]
    return out2d.reshape(*lead_shape, N)


if __name__ == "__main__":
    key = jax.random.PRNGKey(0)
    k_w, k_b, k_x, k_w2, k_b2, k_x2 = jax.random.split(key, 6)

    # --- Test 1: GNMT Classifier at small demo shapes (single-K-tile fast path) ---
    in_features, out_features, init_weight = 32, 64, 0.1
    weight = jax.random.uniform(
        k_w, (out_features, in_features), jnp.float32,
        minval=-init_weight, maxval=init_weight)
    bias = jax.random.uniform(
        k_b, (out_features,), jnp.float32,
        minval=-init_weight, maxval=init_weight)
    # x: [seq=8, batch=2, in_features=32] (GNMT decoder convention)
    x = jax.random.normal(k_x, (8, 2, in_features), jnp.float32)

    params = prepare_classifier_params(weight, bias)  # one-time load-time prep
    out = jax.block_until_ready(classifier_forward(x, params))

    ref = x @ weight.T + bias
    assert out.shape == (8, 2, out_features)
    assert jnp.allclose(out, ref, atol=1e-5, rtol=1e-5)

    # --- Test 2: exercise the multi-K accumulator fallback path ---
    in2, out2 = 256, 256
    weight2 = jax.random.uniform(
        k_w2, (out2, in2), jnp.float32, minval=-0.1, maxval=0.1)
    bias2 = jax.random.uniform(
        k_b2, (out2,), jnp.float32, minval=-0.1, maxval=0.1)
    x2 = jax.random.normal(k_x2, (4, 3, in2), jnp.float32)

    params2 = prepare_classifier_params(weight2, bias2, tk=128, tn=128)
    out_2 = jax.block_until_ready(classifier_forward(x2, params2, tm=8))
    ref2 = x2 @ weight2.T + bias2
    assert jnp.allclose(out_2, ref2, atol=1e-4, rtol=1e-4)

    print("KERNEL_OK")
</pallas_src>

<mosaic_0001>
module attributes {stable_mosaic.version = 11 : i64} {
  func.func @_linear_kernel_single_k(%arg0: i32, %arg1: i32, %arg2: memref<16x128xf32, #tpu.memory_space<vmem>>, %arg3: memref<128x128xf32, #tpu.memory_space<vmem>>, %arg4: memref<1x128xf32, #tpu.memory_space<vmem>>, %arg5: memref<16x128xf32, #tpu.memory_space<vmem>>) attributes {dimension_semantics = [#tpu.dimension_semantics<parallel>, #tpu.dimension_semantics<parallel>], iteration_bounds = array<i64: 1, 1>, scalar_prefetch = 0 : i64, scratch_operands = 0 : i64, tpu.core_type = #tpu.core_type<tc>, window_params = [{transform_indices = @transform_0, window_bounds = array<i64: 16, 128>}, {transform_indices = @transform_1, window_bounds = array<i64: 128, 128>}, {transform_indices = @transform_2, window_bounds = array<i64: 1, 128>}, {transform_indices = @transform_3, window_bounds = array<i64: 16, 128>}]} {
    %c0 = arith.constant 0 : index
    %c0_0 = arith.constant 0 : index
    %0 = vector.load %arg2[%c0, %c0_0] : memref<16x128xf32, #tpu.memory_space<vmem>>, vector<16x128xf32>
    %c0_1 = arith.constant 0 : index
    %c0_2 = arith.constant 0 : index
    %1 = vector.load %arg3[%c0_1, %c0_2] : memref<128x128xf32, #tpu.memory_space<vmem>>, vector<128x128xf32>
    %cst = arith.constant dense<0.000000e+00> : vector<16x128xf32>
    %2 = tpu.matmul %0, %1, %cst {dimension_numbers = #tpu.dot_dimension_numbers<[1], [0], [0], [1], [0, 0, 1, 1], [], []>} : vector<16x128xf32>, vector<128x128xf32>, vector<16x128xf32> -> vector<16x128xf32>
    %c0_3 = arith.constant 0 : index
    %c0_4 = arith.constant 0 : index
    %3 = vector.load %arg4[%c0_3, %c0_4] : memref<1x128xf32, #tpu.memory_space<vmem>>, vector<1x128xf32>
    %4 = vector.broadcast %3 : vector<1x128xf32> to vector<16x128xf32>
    %5 = arith.addf %2, %4 : vector<16x128xf32>
    %c0_5 = arith.constant 0 : index
    %c0_6 = arith.constant 0 : index
    %6 = vector.load %arg5[%c0_5, %c0_6] : memref<16x128xf32, #tpu.memory_space<vmem>>, vector<16x128xf32>
    tpu.vector_store %arg5[%c0_5, %c0_6], %5 {strides = array<i32>} : memref<16x128xf32, #tpu.memory_space<vmem>>, vector<16x128xf32>,
    return
  }
  func.func @transform_0(%arg0: i32, %arg1: i32) -> (i32, i32) {
    %c0_i32 = arith.constant 0 : i32
    %c0_i32_0 = arith.constant 0 : i32
    return %arg0, %c0_i32 : i32, i32
  }
  func.func @transform_1(%arg0: i32, %arg1: i32) -> (i32, i32) {
    %c0_i32 = arith.constant 0 : i32
    %c0_i32_0 = arith.constant 0 : i32
    return %c0_i32, %arg1 : i32, i32
  }
  func.func @transform_2(%arg0: i32, %arg1: i32) -> (i32, i32) {
    %c0_i32 = arith.constant 0 : i32
    %c0_i32_0 = arith.constant 0 : i32
    return %c0_i32, %arg1 : i32, i32
  }
  func.func @transform_3(%arg0: i32, %arg1: i32) -> (i32, i32) {
    %c0_i32 = arith.constant 0 : i32
    return %arg0, %arg1 : i32, i32
  }
}

</mosaic_0001>

<llo_original>
// kernel: tpu_custom_call.1
$region0: #{tpu_custom_call.1}
  #allocation0 [shape = 'u32[]', space=smem, size = 0x4, offset = 0x4, fixed_abs, tag = 'smem constant byte address 0x4 - core index']
  #allocation1 [shape = 'u32[144,128]{1,0:T(1,128)}', space=vmem, size = 0x12000, scoped, tag = 'internal scratch']
  %s0 = inlined_call_operand.hbm [shape: f32[16,128], index: 0, kind: input, shape index: {}]
  %s1 = inlined_call_operand.hbm [shape: f32[128,128], index: 1, kind: input, shape index: {}]
  %s2 = inlined_call_operand.vmem [shape: f32[1,128], index: 2, kind: input, shape index: {}]
  %s3 = inlined_call_operand.hbm [shape: f32[16,128], index: 3, kind: output, shape index: {}]
  %s4 = sld [smem:[#allocation0]]
  $region30: #{tpu_custom_call.1} parent=0
    _
  %s6 = ssub.s32 1, %s4
  %s7 = scalar_select 0, %s6, %s4
  $region1: #{tpu_custom_call.1} parent=0
    #allocation2 [shape = 'u8[8192]{0}', space=vmem, size = 0x2000, scoped, tag = 'input window, operand 0, single buffered']
    #allocation3 [shape = 's32[1]{0}', space=sflag, size = 0x4, scoped, tag = 'scoped memory for tpu_custom_call.1']
    #allocation4 [shape = 's32[1]{0}', space=sflag, size = 0x4, scoped, tag = 'scoped memory for tpu_custom_call.1']
    #allocation5 [shape = 'u8[65536]{0}', space=vmem, size = 0x10000, scoped, tag = 'input window, operand 1, single buffered']
    #allocation6 [shape = 's32[1]{0}', space=sflag, size = 0x4, scoped, tag = 'scoped memory for tpu_custom_call.1']
    #allocation7 [shape = 'u8[8192]{0}', space=vmem, size = 0x2000, scoped, tag = 'output window, operand 0, single buffered']
    %8 = vsyncpa [#allocation3], 0
    %9 = vsyncpa [#allocation6], 0
    %10 = vsyncpa [#allocation4], 0
    // Predicated region
    $region2: #{tpu_custom_call.1} parent=1 // pred_check
      _
    $region3: #{tpu_custom_call.1} parent=1 // pred_check_branch
      %12 = sbr.rel (0) target = $region5
    $region4: #{tpu_custom_call.1} parent=1 // pred_region
      %s14 = ssub.s32 256, 256
      %15 = vsyncadd [#allocation3], %s14
      %s16 = sshll.u32 [#allocation2], 4
      %s17 = int_to_ptr.vmem [resolvable:$true] %s16
      %22 = dma.hbm_to_vmem [thread:$0]  %s0, 256, %s17, [#allocation3], 128, 128, 8
    $region5: #{tpu_custom_call.1} parent=1 // pred_fallthru
      _
    // Predicated region
    $region6: #{tpu_custom_call.1} parent=1 // pred_check
      _
    $region7: #{tpu_custom_call.1} parent=1 // pred_check_branch
      %24 = sbr.rel (0) target = $region9
    $region8: #{tpu_custom_call.1} parent=1 // pred_region
      %s26 = ssub.s32 2048, 2048
      %27 = vsyncadd [#allocation6], %s26
      %s28 = sshll.u32 [#allocation5], 4
      %s29 = int_to_ptr.vmem [resolvable:$true] %s28
      %34 = dma.hbm_to_vmem [thread:$0]  %s1, 2048, %s29, [#allocation6], 128, 128, 8
    $region9: #{tpu_custom_call.1} parent=1 // pred_fallthru
      _
    // Predicated region
    $region10: #{tpu_custom_call.1} parent=1 // pred_check
      _
    $region11: #{tpu_custom_call.1} parent=1 // pred_check_branch
      %36 = sbr.rel (0) target = $region13
    $region12: #{tpu_custom_call.1} parent=1 // pred_region
      _
    $region13: #{tpu_custom_call.1} parent=1 // pred_fallthru
      _
    // Predicated region
    $region14: #{tpu_custom_call.1} parent=1 // pred_check
      _
    $region15: #{tpu_custom_call.1} parent=1 // pred_check_branch
      %38 = sbr.rel (0) target = $region17
    $region16: #{tpu_custom_call.1} parent=1 // pred_region
      %39 = dma.done [#allocation3], 256
    $region17: #{tpu_custom_call.1} parent=1 // pred_fallthru
      _
    // Predicated region
    $region18: #{tpu_custom_call.1} parent=1 // pred_check
      _
    $region19: #{tpu_custom_call.1} parent=1 // pred_check_branch
      %41 = sbr.rel (0) target = $region21
    $region20: #{tpu_custom_call.1} parent=1 // pred_region
      %42 = dma.done [#allocation6], 2048
    $region21: #{tpu_custom_call.1} parent=1 // pred_fallthru
      _
    %v43 = vld [vmem:[#allocation2] sm:$0xff]
    %v44 = vld [vmem:[#allocation2 + $0x8] sm:$0xff]
    %v45 = vld [vmem:[#allocation5] sm:$0xff]
    %v46 = vld [vmem:[#allocation5 + $0x8] sm:$0xff]
    %v47 = vld [vmem:[#allocation5 + $0x10] sm:$0xff]
    %v48 = vld [vmem:[#allocation5 + $0x18] sm:$0xff]
    %v49 = vld [vmem:[#allocation5 + $0x20] sm:$0xff]
    %v50 = vld [vmem:[#allocation5 + $0x28] sm:$0xff]
    %v51 = vld [vmem:[#allocation5 + $0x30] sm:$0xff]
    %v52 = vld [vmem:[#allocation5 + $0x38] sm:$0xff]
    %v53 = vld [vmem:[#allocation5 + $0x40] sm:$0xff]
    %v54 = vld [vmem:[#allocation5 + $0x48] sm:$0xff]
    %v55 = vld [vmem:[#allocation5 + $0x50] sm:$0xff]
    %v56 = vld [vmem:[#allocation5 + $0x58] sm:$0xff]
    %v57 = vld [vmem:[#allocation5 + $0x60] sm:$0xff]
    %v58 = vld [vmem:[#allocation5 + $0x68] sm:$0xff]
    %v59 = vld [vmem:[#allocation5 + $0x70] sm:$0xff]
    %v60 = vld [vmem:[#allocation5 + $0x78] sm:$0xff]
    %v61 = vld [vmem:[%s2] sm:$0x1]
    %v63 = vlaneseq
    %v64 = vshrl.u32 %v63, 7
    %v65 = vsub.s32 0, %v64
    %v66 = vrot.slane %v61, %v65
    %68 = vmatprep.subr.mxu0 0.0
    %69 = vmatpush1.msra.mxu0 %v45
    %70 = vmatprep.subr.mxu0 0.0
    %71 = vmatpush1.msra.mxu0 %v46
    %72 = vmatprep.subr.mxu0 0.0
    %73 = vmatpush1.msra.mxu0 %v47
    %74 = vmatprep.subr.mxu0 0.0
    %75 = vmatpush1.msra.mxu0 %v48
    %76 = vmatprep.subr.mxu0 0.0
    %77 = vmatpush1.msra.mxu0 %v49
    %78 = vmatprep.subr.mxu0 0.0
    %79 = vmatpush1.msra.mxu0 %v50
    %80 = vmatprep.subr.mxu0 0.0
    %81 = vmatpush1.msra.mxu0 %v51
    %82 = vmatprep.subr.mxu0 0.0
    %83 = vmatpush1.msra.mxu0 %v52
    %84 = vmatprep.subr.mxu0 0.0
    %85 = vmatpush1.msra.mxu0 %v53
    %86 = vmatprep.subr.mxu0 0.0
    %87 = vmatpush1.msra.mxu0 %v54
    %88 = vmatprep.subr.mxu0 0.0
    %89 = vmatpush1.msra.mxu0 %v55
    %90 = vmatprep.subr.mxu0 0.0
    %91 = vmatpush1.msra.mxu0 %v56
    %92 = vmatprep.subr.mxu0 0.0
    %93 = vmatpush1.msra.mxu0 %v57
    %94 = vmatprep.subr.mxu0 0.0
    %95 = vmatpush1.msra.mxu0 %v58
    %96 = vmatprep.subr.mxu0 0.0
    %97 = vmatpush1.msra.mxu0 %v59
    %98 = vmatprep.subr.mxu0 0.0
    %99 = vmatpush1.msra.mxu0 %v60
    %100 = vmatprep.subr.mxu0 0.0
    %101 = vmatpush1.msra.mxu0 0.0
    %102 = vmatprep.subr.mxu0 0.0
    %103 = vmatpush1.msra.mxu0 0.0
    %104 = vmatprep.subr.mxu0 0.0
    %105 = vmatpush1.msra.mxu0 0.0
    %106 = vmatprep.subr.mxu0 0.0
    %107 = vmatpush1.msra.mxu0 0.0
    %108 = vmatprep.subr.mxu0 0.0
    %109 = vmatpush1.msra.mxu0 0.0
    %110 = vmatprep.subr.mxu0 0.0
    %111 = vmatpush1.msra.mxu0 0.0
    %112 = vmatprep.subr.mxu0 0.0
    %113 = vmatpush1.msra.mxu0 0.0
    %114 = vmatprep.subr.mxu0 0.0
    %115 = vmatpush1.msra.mxu0 0.0
    %116 = vmatprep.subr.mxu0 0.0
    %117 = vmatpush1.msra.mxu0 0.0
    %118 = vmatprep.subr.mxu0 0.0
    %119 = vmatpush1.msra.mxu0 0.0
    %120 = vmatprep.subr.mxu0 0.0
    %121 = vmatpush1.msra.mxu0 0.0
    %122 = vmatprep.subr.mxu0 0.0
    %123 = vmatpush1.msra.mxu0 0.0
    %124 = vmatprep.subr.mxu0 0.0
    %125 = vmatpush1.msra.mxu0 0.0
    %126 = vmatprep.subr.mxu0 0.0
    %127 = vmatpush1.msra.mxu0 0.0
    %128 = vmatprep.subr.mxu0 0.0
    %129 = vmatpush1.msra.mxu0 0.0
    %130 = vmatprep.subr.mxu0 0.0
    %131 = vmatpush1.msra.mxu0 0.0
    %132 = vmatprep.mubr.f32.mxu0 0.0
    %133 = vmatmul.mubr.f32.gmra.mrb[0].mxu0 %v43
    %v134 = vpop.f32.mrb[0].mxu0
    %v135 = vadd.f32 %v66, %v134
    %v136 = vpop.f32.mrb[0].mxu0
    %137 = vmatprep.mubr.f32.mxu0 0.0
    %138 = vmatmul.mubr.f32.gmra.mrb[0].mxu0 %v44
    %v139 = vpop.f32.mrb[0].mxu0
    %v140 = vadd.f32 %v66, %v139
    %v141 = vpop.f32.mrb[0].mxu0
    %142 = vdwg.mxu0
    %143 = vst [vmem:[#allocation7] sm:$0xff] %v135
    %144 = vst [vmem:[#allocation7 + $0x8] sm:$0xff] %v140
    // Predicated region
    $region22: #{tpu_custom_call.1} parent=1 // pred_check
      _
    $region23: #{tpu_custom_call.1} parent=1 // pred_check_branch
      %146 = sbr.rel (0) target = $region25
    $region24: #{tpu_custom_call.1} parent=1 // pred_region
      %s148 = ssub.s32 256, 256
      %149 = vsyncadd [#allocation4], %s148
      %s150 = sshll.u32 [#allocation7], 4
      %s151 = int_to_ptr.vmem [resolvable:$true] %s150
      %156 = dma.vmem_to_hbm [thread:$0]  %s151, 256, %s3, [#allocation4], 128, 128, 8
    $region25: #{tpu_custom_call.1} parent=1 // pred_fallthru
      _
    // Predicated region
    $region26: #{tpu_custom_call.1} parent=1 // pred_check
      _
    $region27: #{tpu_custom_call.1} parent=1 // pred_check_branch
      %158 = sbr.rel (0) target = $region29
    $region28: #{tpu_custom_call.1} parent=1 // pred_region
      %159 = dma.done [#allocation4], 256
    $region29: #{tpu_custom_call.1} parent=1 // pred_fallthru
      _
    %160 = vsyncpa [#allocation3], 1
    %161 = vsyncpa [#allocation6], 1
    %162 = vsyncpa [#allocation4], 1

</llo_original>
